<compile_context>
chip_gen: v7x
topology: tpu7x:2x2x1
jax: 0.10.0
libtpu: 0.0.40
codegen_flags: <defaults>
</compile_context>

<pallas_src>
import functools
import math

import jax
import jax.numpy as jnp
from jax.experimental import pallas as pl
from jax.experimental.pallas import tpu as pltpu


def _fused_mlp_kernel(*refs, activations, lrelu_val):
    """refs = (x_ref, w0, b0, w1, b1, ..., o_ref). Whole MLP on one batch tile."""
    n_layers = len(activations)
    assert len(refs) == 2 + 2 * n_layers
    x_ref = refs[0]
    o_ref = refs[-1]
    wb_refs = refs[1:-1]

    h = x_ref[...]  # bf16 [TB, Din] (pre-cast in wrapper)
    for i in range(n_layers):
        w = wb_refs[2 * i][...]       # [Din_i, Dout_i] bf16 (pre-cast in wrapper)
        b = wb_refs[2 * i + 1][...]   # [1, Dout_i] f32
        # MXU matmul in bf16 with f32 accumulation; epilogue stays f32.
        y = jnp.dot(
            h.astype(jnp.bfloat16),
            w,
            preferred_element_type=jnp.float32,
        )
        y = y + b
        act = activations[i]
        if act == "relu":
            y = jnp.maximum(y, 0.0)
        elif act == "lrelu":
            y = jnp.where(y > 0.0, y, lrelu_val * y)
        elif act == "tanh":
            y = jnp.tanh(y)
        elif act == "sigm":
            y = jax.nn.sigmoid(y)
        # act == "" -> identity
        h = y
    o_ref[...] = h.astype(o_ref.dtype)


_MAX_BATCH_TILE = 4096  # ~12-15 MiB of VMEM at these widths; fits all generations.


def _round_up(x, m):
    return ((x + m - 1) // m) * m


def _choose_batch_tile(batch):
    """Large tile (overhead-bound kernel), but >=2 tiles when B > 16 so v7x's
    two TensorCores can each take a 'parallel' grid slice."""
    if batch <= 16:
        return _round_up(max(batch, 8), 8)
    half = _round_up(-(-batch // 2), 8)  # round_up(ceil(B/2), 8)
    return min(half, _MAX_BATCH_TILE)


def _fused_generator_forward(params, x, activations, lrelu_val):
    """params: list of (w [Din,Dout] f32, b [Dout] f32); x: [B, noise_dim] f32."""
    B, Din = x.shape
    Dout = params[-1][0].shape[1]

    tb = _choose_batch_tile(B)
    n_tiles = pl.cdiv(B, tb)  # partial trailing block handled by Pallas (masked store)

    # Stream x and weights as bf16; keep biases / accumulation / epilogue in f32.
    x_bf16 = x.astype(jnp.bfloat16)

    flat_inputs = [x_bf16]
    in_specs = [pl.BlockSpec((tb, Din), lambda i: (i, 0))]
    weight_bytes = 0
    max_width = Din
    for (w, b) in params:
        din, dout = w.shape
        max_width = max(max_width, dout)
        flat_inputs.append(w.astype(jnp.bfloat16))
        in_specs.append(pl.BlockSpec((din, dout), lambda i: (0, 0)))
        flat_inputs.append(b.reshape(1, dout))  # f32 bias
        in_specs.append(pl.BlockSpec((1, dout), lambda i: (0, 0)))
        weight_bytes += din * dout * 2 + dout * 4

    out_spec = pl.BlockSpec((tb, Dout), lambda i: (i, 0))

    # VMEM budget: resident weights + double-buffered x(bf16)/out(f32) tiles +
    # f32 intermediates, with 2x headroom; floored at 32 MiB (>= default scoped
    # VMEM everywhere) and capped safely under v7x's 64 MiB physical VMEM.
    tile_bytes = 2 * (tb * Din * 2 + tb * Dout * 4)
    interm_bytes = 4 * tb * max_width * 4
    vmem_limit = max(32 * 1024 * 1024, 2 * (weight_bytes + tile_bytes + interm_bytes))
    vmem_limit = min(vmem_limit, 60 * 1024 * 1024)

    flops = sum(2 * B * w.shape[0] * w.shape[1] for w, _ in params)
    transcendentals = B * Dout if activations[-1] in ("tanh", "sigm") else 0
    bytes_accessed = (
        sum(int(a.size) * a.dtype.itemsize for a in flat_inputs) + B * Dout * 4
    )

    kernel = functools.partial(
        _fused_mlp_kernel, activations=activations, lrelu_val=lrelu_val
    )

    out = pl.pallas_call(
        kernel,
        out_shape=jax.ShapeDtypeStruct((B, Dout), jnp.float32),
        grid=(n_tiles,),
        in_specs=in_specs,
        out_specs=out_spec,
        compiler_params=pltpu.CompilerParams(
            dimension_semantics=("parallel",),
            vmem_limit_bytes=int(vmem_limit),
        ),
        cost_estimate=pl.CostEstimate(
            flops=int(flops),
            transcendentals=int(transcendentals),
            bytes_accessed=int(bytes_accessed),
        ),
    )(*flat_inputs)

    return out


class GeneratorOpts:
    # Mirrors the fields the PyTorch module reads from `opts`.
    noise_dim = 32
    G_hidden = [64, 64]
    G_output_size = 128
    G_activation = "relu"        # hidden-layer activation
    G_out_activation = "tanh"    # final activation
    lrelu_val = 0.2


def init_generator_params(opts, key):
    """Deterministic init matching nn.Linear's U(-1/sqrt(fan_in), 1/sqrt(fan_in))."""
    dims = [opts.noise_dim] + list(opts.G_hidden) + [opts.G_output_size]
    params = []
    for i in range(len(dims) - 1):
        din, dout = dims[i], dims[i + 1]
        key, kw, kb = jax.random.split(key, 3)
        bound = 1.0 / math.sqrt(din)
        w = jax.random.uniform(kw, (din, dout), jnp.float32, -bound, bound)
        b = jax.random.uniform(kb, (dout,), jnp.float32, -bound, bound)
        params.append((w, b))
    return params


def make_generator_forward(opts):
    """Returns a jitted fn(params, x) implementing generator.forward."""
    n_hidden = len(opts.G_hidden)
    # Hidden layers use G_activation; final Linear has no activation and is fused
    # with the trailing Tanh/Sigmoid module into the last layer's epilogue.
    activations = tuple([opts.G_activation] * n_hidden + [opts.G_out_activation])
    lrelu_val = float(opts.lrelu_val)

    @jax.jit
    def fwd(params, x):
        return _fused_generator_forward(params, x, activations, lrelu_val)

    return fwd


def _reference_forward(params, x, activations, lrelu_val):
    """Pure-JAX f32 reference of the PyTorch generator forward."""
    h = x
    for (w, b), act in zip(params, activations):
        y = h @ w + b
        if act == "relu":
            y = jnp.maximum(y, 0.0)
        elif act == "lrelu":
            y = jnp.where(y > 0.0, y, lrelu_val * y)
        elif act == "tanh":
            y = jnp.tanh(y)
        elif act == "sigm":
            y = jax.nn.sigmoid(y)
        h = y
    return h


if __name__ == "__main__":
    opts = GeneratorOpts()
    key = jax.random.PRNGKey(0)
    key_params, key_x, key_x2 = jax.random.split(key, 3)

    params = init_generator_params(opts, key_params)
    generator_forward = make_generator_forward(opts)
    activations = tuple(
        [opts.G_activation] * len(opts.G_hidden) + [opts.G_out_activation]
    )

    # Small primary example (single tile).
    B = 8
    x = jax.random.normal(key_x, (B, opts.noise_dim), jnp.float32)
    out = generator_forward(params, x)
    out = jax.block_until_ready(out)

    assert out.shape == (B, opts.G_output_size)
    assert out.dtype == jnp.float32
    assert bool(jnp.all(jnp.abs(out) <= 1.0))  # tanh range sanity
    ref = _reference_forward(params, x, activations, float(opts.lrelu_val))
    assert bool(jnp.max(jnp.abs(out - ref)) < 5e-2)  # bf16-matmul tolerance

    # Secondary check: multi-tile grid with a partial trailing block
    # (exercises the >=2-tile v7x path and the unpadded boundary handling).
    B2 = 300
    x2 = jax.random.normal(key_x2, (B2, opts.noise_dim), jnp.float32)
    out2 = jax.block_until_ready(generator_forward(params, x2))
    assert out2.shape == (B2, opts.G_output_size)
    ref2 = _reference_forward(params, x2, activations, float(opts.lrelu_val))
    assert bool(jnp.max(jnp.abs(out2 - ref2)) < 5e-2)

    print("KERNEL_OK")
</pallas_src>

<mosaic_0001>
module attributes {stable_mosaic.version = 11 : i64} {
  func.func @_fused_mlp_kernel(%arg0: i32, %arg1: memref<8x32xbf16, #tpu.memory_space<vmem>>, %arg2: memref<32x64xbf16, #tpu.memory_space<vmem>>, %arg3: memref<1x64xf32, #tpu.memory_space<vmem>>, %arg4: memref<64x64xbf16, #tpu.memory_space<vmem>>, %arg5: memref<1x64xf32, #tpu.memory_space<vmem>>, %arg6: memref<64x128xbf16, #tpu.memory_space<vmem>>, %arg7: memref<1x128xf32, #tpu.memory_space<vmem>>, %arg8: memref<8x128xf32, #tpu.memory_space<vmem>>) attributes {dimension_semantics = [#tpu.dimension_semantics<parallel>], iteration_bounds = array<i64: 1>, scalar_prefetch = 0 : i64, scratch_operands = 0 : i64, tpu.core_type = #tpu.core_type<tc>, window_params = [{transform_indices = @transform_0, window_bounds = array<i64: 8, 32>}, {pipeline_mode = #tpu.pipeline_mode<synchronous>, transform_indices = @transform_1, window_bounds = array<i64: 32, 64>}, {pipeline_mode = #tpu.pipeline_mode<synchronous>, transform_indices = @transform_2, window_bounds = array<i64: 1, 64>}, {pipeline_mode = #tpu.pipeline_mode<synchronous>, transform_indices = @transform_3, window_bounds = array<i64: 64, 64>}, {pipeline_mode = #tpu.pipeline_mode<synchronous>, transform_indices = @transform_4, window_bounds = array<i64: 1, 64>}, {pipeline_mode = #tpu.pipeline_mode<synchronous>, transform_indices = @transform_5, window_bounds = array<i64: 64, 128>}, {pipeline_mode = #tpu.pipeline_mode<synchronous>, transform_indices = @transform_6, window_bounds = array<i64: 1, 128>}, {transform_indices = @transform_7, window_bounds = array<i64: 8, 128>}]} {
    %c0 = arith.constant 0 : index
    %c0_0 = arith.constant 0 : index
    %0 = vector.load %arg1[%c0, %c0_0] : memref<8x32xbf16, #tpu.memory_space<vmem>>, vector<8x32xbf16>
    %c0_1 = arith.constant 0 : index
    %c0_2 = arith.constant 0 : index
    %1 = vector.load %arg2[%c0_1, %c0_2] : memref<32x64xbf16, #tpu.memory_space<vmem>>, vector<32x64xbf16>
    %c0_3 = arith.constant 0 : index
    %c0_4 = arith.constant 0 : index
    %2 = vector.load %arg3[%c0_3, %c0_4] : memref<1x64xf32, #tpu.memory_space<vmem>>, vector<1x64xf32>
    %cst = arith.constant dense<0.000000e+00> : vector<8x64xf32>
    %3 = tpu.matmul %0, %1, %cst {dimension_numbers = #tpu.dot_dimension_numbers<[1], [0], [0], [1], [0, 0, 1, 1], [], []>} : vector<8x32xbf16>, vector<32x64xbf16>, vector<8x64xf32> -> vector<8x64xf32>
    %4 = vector.broadcast %2 : vector<1x64xf32> to vector<8x64xf32>
    %5 = arith.addf %3, %4 : vector<8x64xf32>
    %cst_5 = arith.constant 0.000000e+00 : f32
    %6 = vector.broadcast %cst_5 : f32 to vector<8x64xf32>
    %7 = arith.maximumf %5, %6 : vector<8x64xf32>
    %c0_6 = arith.constant 0 : index
    %c0_7 = arith.constant 0 : index
    %8 = vector.load %arg4[%c0_6, %c0_7] : memref<64x64xbf16, #tpu.memory_space<vmem>>, vector<64x64xbf16>
    %c0_8 = arith.constant 0 : index
    %c0_9 = arith.constant 0 : index
    %9 = vector.load %arg5[%c0_8, %c0_9] : memref<1x64xf32, #tpu.memory_space<vmem>>, vector<1x64xf32>
    %10 = arith.truncf %7 : vector<8x64xf32> to vector<8x64xbf16>
    %cst_10 = arith.constant dense<0.000000e+00> : vector<8x64xf32>
    %11 = tpu.matmul %10, %8, %cst_10 {dimension_numbers = #tpu.dot_dimension_numbers<[1], [0], [0], [1], [0, 0, 1, 1], [], []>} : vector<8x64xbf16>, vector<64x64xbf16>, vector<8x64xf32> -> vector<8x64xf32>
    %12 = vector.broadcast %9 : vector<1x64xf32> to vector<8x64xf32>
    %13 = arith.addf %11, %12 : vector<8x64xf32>
    %cst_11 = arith.constant 0.000000e+00 : f32
    %14 = vector.broadcast %cst_11 : f32 to vector<8x64xf32>
    %15 = arith.maximumf %13, %14 : vector<8x64xf32>
    %c0_12 = arith.constant 0 : index
    %c0_13 = arith.constant 0 : index
    %16 = vector.load %arg6[%c0_12, %c0_13] : memref<64x128xbf16, #tpu.memory_space<vmem>>, vector<64x128xbf16>
    %c0_14 = arith.constant 0 : index
    %c0_15 = arith.constant 0 : index
    %17 = vector.load %arg7[%c0_14, %c0_15] : memref<1x128xf32, #tpu.memory_space<vmem>>, vector<1x128xf32>
    %18 = arith.truncf %15 : vector<8x64xf32> to vector<8x64xbf16>
    %cst_16 = arith.constant dense<0.000000e+00> : vector<8x128xf32>
    %19 = tpu.matmul %18, %16, %cst_16 {dimension_numbers = #tpu.dot_dimension_numbers<[1], [0], [0], [1], [0, 0, 1, 1], [], []>} : vector<8x64xbf16>, vector<64x128xbf16>, vector<8x128xf32> -> vector<8x128xf32>
    %20 = vector.broadcast %17 : vector<1x128xf32> to vector<8x128xf32>
    %21 = arith.addf %19, %20 : vector<8x128xf32>
    %22 = math.tanh %21 : vector<8x128xf32>
    %c0_17 = arith.constant 0 : index
    %c0_18 = arith.constant 0 : index
    %23 = vector.load %arg8[%c0_17, %c0_18] : memref<8x128xf32, #tpu.memory_space<vmem>>, vector<8x128xf32>
    tpu.vector_store %arg8[%c0_17, %c0_18], %22 {strides = array<i32>} : memref<8x128xf32, #tpu.memory_space<vmem>>, vector<8x128xf32>,
    return
  }
  func.func @transform_0(%arg0: i32) -> (i32, i32) {
    %c0_i32 = arith.constant 0 : i32
    %c0_i32_0 = arith.constant 0 : i32
    return %arg0, %c0_i32 : i32, i32
  }
  func.func @transform_1(%arg0: i32) -> (i32, i32) {
    %c0_i32 = arith.constant 0 : i32
    %c0_i32_0 = arith.constant 0 : i32
    %c0_i32_1 = arith.constant 0 : i32
    return %c0_i32, %c0_i32_0 : i32, i32
  }
  func.func @transform_2(%arg0: i32) -> (i32, i32) {
    %c0_i32 = arith.constant 0 : i32
    %c0_i32_0 = arith.constant 0 : i32
    %c0_i32_1 = arith.constant 0 : i32
    return %c0_i32, %c0_i32_0 : i32, i32
  }
  func.func @transform_3(%arg0: i32) -> (i32, i32) {
    %c0_i32 = arith.constant 0 : i32
    %c0_i32_0 = arith.constant 0 : i32
    %c0_i32_1 = arith.constant 0 : i32
    return %c0_i32, %c0_i32_0 : i32, i32
  }
  func.func @transform_4(%arg0: i32) -> (i32, i32) {
    %c0_i32 = arith.constant 0 : i32
    %c0_i32_0 = arith.constant 0 : i32
    %c0_i32_1 = arith.constant 0 : i32
    return %c0_i32, %c0_i32_0 : i32, i32
  }
  func.func @transform_5(%arg0: i32) -> (i32, i32) {
    %c0_i32 = arith.constant 0 : i32
    %c0_i32_0 = arith.constant 0 : i32
    %c0_i32_1 = arith.constant 0 : i32
    return %c0_i32, %c0_i32_0 : i32, i32
  }
  func.func @transform_6(%arg0: i32) -> (i32, i32) {
    %c0_i32 = arith.constant 0 : i32
    %c0_i32_0 = arith.constant 0 : i32
    %c0_i32_1 = arith.constant 0 : i32
    return %c0_i32, %c0_i32_0 : i32, i32
  }
  func.func @transform_7(%arg0: i32) -> (i32, i32) {
    %c0_i32 = arith.constant 0 : i32
    %c0_i32_0 = arith.constant 0 : i32
    return %arg0, %c0_i32 : i32, i32
  }
}

</mosaic_0001>

<llo_original>
// kernel: fwd.1
$region0: #{fwd.1}
  #allocation0 [shape = 'u32[]', space=smem, size = 0x4, offset = 0x4, fixed_abs, tag = 'smem constant byte address 0x4 - core index']
  #allocation1 [shape = 'u32[144,128]{1,0:T(1,128)}', space=vmem, size = 0x12000, scoped, tag = 'internal scratch']
  %s0 = inlined_call_operand.vmem [shape: bf16[8,32], index: 0, kind: input, shape index: {}]
  %s1 = inlined_call_operand.vmem [shape: bf16[32,64], index: 1, kind: input, shape index: {}]
  %s2 = inlined_call_operand.vmem [shape: f32[1,64], index: 2, kind: input, shape index: {}]
  %s3 = inlined_call_operand.vmem [shape: bf16[64,64], index: 3, kind: input, shape index: {}]
  %s4 = inlined_call_operand.vmem [shape: f32[1,64], index: 4, kind: input, shape index: {}]
  %s5 = inlined_call_operand.vmem [shape: bf16[64,128], index: 5, kind: input, shape index: {}]
  %s6 = inlined_call_operand.vmem [shape: f32[1,128], index: 6, kind: input, shape index: {}]
  %s7 = inlined_call_operand.hbm [shape: f32[8,128], index: 7, kind: output, shape index: {}]
  %s8 = sld [smem:[#allocation0]]
  $region38: #{fwd.1} parent=0
    _
  %s10 = ssub.s32 1, %s8
  %s11 = scalar_select 0, %s10, %s8
  $region1: #{fwd.1} parent=0
    #allocation2 [shape = 'u8[4096]{0}', space=vmem, size = 0x1000, scoped, tag = 'output window, operand 0, single buffered']
    #allocation3 [shape = 's32[1]{0}', space=sflag, size = 0x4, scoped, tag = 'scoped memory for fwd.1']
    %12 = vsyncpa [#allocation3], 0
    // Predicated region
    $region2: #{fwd.1} parent=1 // pred_check
      _
    $region3: #{fwd.1} parent=1 // pred_check_branch
      %14 = sbr.rel (0) target = $region5
    $region4: #{fwd.1} parent=1 // pred_region
      _
    $region5: #{fwd.1} parent=1 // pred_fallthru
      _
    // Predicated region
    $region6: #{fwd.1} parent=1 // pred_check
      _
    $region7: #{fwd.1} parent=1 // pred_check_branch
      %16 = sbr.rel (0) target = $region9
    $region8: #{fwd.1} parent=1 // pred_region
      _
    $region9: #{fwd.1} parent=1 // pred_fallthru
      _
    // Predicated region
    $region10: #{fwd.1} parent=1 // pred_check
      _
    $region11: #{fwd.1} parent=1 // pred_check_branch
      %18 = sbr.rel (0) target = $region13
    $region12: #{fwd.1} parent=1 // pred_region
      _
    $region13: #{fwd.1} parent=1 // pred_fallthru
      _
    // Predicated region
    $region14: #{fwd.1} parent=1 // pred_check
      _
    $region15: #{fwd.1} parent=1 // pred_check_branch
      %20 = sbr.rel (0) target = $region17
    $region16: #{fwd.1} parent=1 // pred_region
      _
    $region17: #{fwd.1} parent=1 // pred_fallthru
      _
    // Predicated region
    $region18: #{fwd.1} parent=1 // pred_check
      _
    $region19: #{fwd.1} parent=1 // pred_check_branch
      %22 = sbr.rel (0) target = $region21
    $region20: #{fwd.1} parent=1 // pred_region
      _
    $region21: #{fwd.1} parent=1 // pred_fallthru
      _
    // Predicated region
    $region22: #{fwd.1} parent=1 // pred_check
      _
    $region23: #{fwd.1} parent=1 // pred_check_branch
      %24 = sbr.rel (0) target = $region25
    $region24: #{fwd.1} parent=1 // pred_region
      _
    $region25: #{fwd.1} parent=1 // pred_fallthru
      _
    // Predicated region
    $region26: #{fwd.1} parent=1 // pred_check
      _
    $region27: #{fwd.1} parent=1 // pred_check_branch
      %26 = sbr.rel (0) target = $region29
    $region28: #{fwd.1} parent=1 // pred_region
      _
    $region29: #{fwd.1} parent=1 // pred_fallthru
      _
    %v28 = vld [vmem:[%s0] sm:$0xf]
    %v29 = vld [vmem:[%s1] sm:$0xf]
    %v30 = vld [vmem:[%s1 + $0x4] sm:$0xf]
    %v31 = vld [vmem:[%s1 + $0x8] sm:$0xf]
    %v32 = vld [vmem:[%s1 + $0xc] sm:$0xf]
    %v33 = vld [vmem:[%s2] sm:$0x1]
    %v35 = vlaneseq
    %v36 = vshrl.u32 %v35, 7
    %v37 = vsub.s32 0, %v36
    %v38 = vrot.slane %v33, %v37
    %v44 = vunpack.c.l.b16 %v29
    %v45 = vunpack.c.l.b16 %v30
    %v46 = vunpack.c.l.b16 %v31
    %v47 = vunpack.c.l.b16 %v32
    %v48 = vpack.c.b16 %v45, %v44
    %v49 = vpack.c.b16 %v47, %v46
    %vm52 = vcmask 261120
    %v54 = vsel %vm52, %v28, 0
    %56 = vmatprep.subr.bf16.mxu0 0
    %57 = vmatpush1.bf16.msra.mxu0 %v48
    %58 = vmatprep.subr.bf16.mxu0 0
    %59 = vmatpush1.bf16.msra.mxu0 %v49
    %60 = vmatprep.subr.bf16.mxu0 0
    %61 = vmatpush1.bf16.msra.mxu0 0
    %62 = vmatprep.subr.bf16.mxu0 0
    %63 = vmatpush1.bf16.msra.mxu0 0
    %64 = vmatprep.subr.bf16.mxu0 0
    %65 = vmatpush1.bf16.msra.mxu0 0
    %66 = vmatprep.subr.bf16.mxu0 0
    %67 = vmatpush1.bf16.msra.mxu0 0
    %68 = vmatprep.subr.bf16.mxu0 0
    %69 = vmatpush1.bf16.msra.mxu0 0
    %70 = vmatprep.subr.bf16.mxu0 0
    %71 = vmatpush1.bf16.msra.mxu0 0
    %72 = vmatprep.subr.bf16.mxu0 0
    %73 = vmatpush1.bf16.msra.mxu0 0
    %74 = vmatprep.subr.bf16.mxu0 0
    %75 = vmatpush1.bf16.msra.mxu0 0
    %76 = vmatprep.subr.bf16.mxu0 0
    %77 = vmatpush1.bf16.msra.mxu0 0
    %78 = vmatprep.subr.bf16.mxu0 0
    %79 = vmatpush1.bf16.msra.mxu0 0
    %80 = vmatprep.subr.bf16.mxu0 0
    %81 = vmatpush1.bf16.msra.mxu0 0
    %82 = vmatprep.subr.bf16.mxu0 0
    %83 = vmatpush1.bf16.msra.mxu0 0
    %84 = vmatprep.subr.bf16.mxu0 0
    %85 = vmatpush1.bf16.msra.mxu0 0
    %86 = vmatprep.subr.bf16.mxu0 0
    %87 = vmatpush1.bf16.msra.mxu0 0
    %88 = vmatprep.mubr.bf16.mxu0 0
    %89 = vmatmul.mubr.bf16.gmra.mrb[0].mxu0 %v54
    %v90 = vpop.f32.mrb[0].mxu0
    %v91 = vadd.f32 %v38, %v90
    %v92 = vpop.f32.mrb[0].mxu0
    %v93 = vpop.f32.mrb[0].mxu0
    %v94 = vpop.f32.mrb[0].mxu0
    %95 = vdwg.mxu0
    %v96 = vmax.f32 %v91, 0.0
    %v97 = vld [vmem:[%s3] sm:$0xf]
    %v98 = vld [vmem:[%s3 + $0x4] sm:$0xf]
    %v99 = vld [vmem:[%s3 + $0x8] sm:$0xf]
    %v100 = vld [vmem:[%s3 + $0xc] sm:$0xf]
    %v101 = vld [vmem:[%s3 + $0x10] sm:$0xf]
    %v102 = vld [vmem:[%s3 + $0x14] sm:$0xf]
    %v103 = vld [vmem:[%s3 + $0x18] sm:$0xf]
    %v104 = vld [vmem:[%s3 + $0x1c] sm:$0xf]
    %v105 = vld [vmem:[%s4] sm:$0x1]
    %v106 = vpack.c.bf16 %v96, %v96
    %v108 = vlaneseq
    %v109 = vshrl.u32 %v108, 7
    %v110 = vsub.s32 0, %v109
    %v111 = vrot.slane %v105, %v110
    %v121 = vunpack.c.l.b16 %v97
    %v122 = vunpack.c.l.b16 %v98
    %v123 = vunpack.c.l.b16 %v99
    %v124 = vunpack.c.l.b16 %v100
    %v125 = vunpack.c.l.b16 %v101
    %v126 = vunpack.c.l.b16 %v102
    %v127 = vunpack.c.l.b16 %v103
    %v128 = vunpack.c.l.b16 %v104
    %v129 = vpack.c.b16 %v122, %v121
    %v130 = vpack.c.b16 %v124, %v123
    %v131 = vpack.c.b16 %v126, %v125
    %v132 = vpack.c.b16 %v128, %v127
    %vm137 = vcmask 523264
    %v139 = vsel %vm137, %v106, 0
    %141 = vmatprep.subr.bf16.mxu0 0
    %142 = vmatpush1.bf16.msra.mxu0 %v129
    %143 = vmatprep.subr.bf16.mxu0 0
    %144 = vmatpush1.bf16.msra.mxu0 %v130
    %145 = vmatprep.subr.bf16.mxu0 0
    %146 = vmatpush1.bf16.msra.mxu0 %v131
    %147 = vmatprep.subr.bf16.mxu0 0
    %148 = vmatpush1.bf16.msra.mxu0 %v132
    %149 = vmatprep.subr.bf16.mxu0 0
    %150 = vmatpush1.bf16.msra.mxu0 0
    %151 = vmatprep.subr.bf16.mxu0 0
    %152 = vmatpush1.bf16.msra.mxu0 0
    %153 = vmatprep.subr.bf16.mxu0 0
    %154 = vmatpush1.bf16.msra.mxu0 0
    %155 = vmatprep.subr.bf16.mxu0 0
    %156 = vmatpush1.bf16.msra.mxu0 0
    %157 = vmatprep.subr.bf16.mxu0 0
    %158 = vmatpush1.bf16.msra.mxu0 0
    %159 = vmatprep.subr.bf16.mxu0 0
    %160 = vmatpush1.bf16.msra.mxu0 0
    %161 = vmatprep.subr.bf16.mxu0 0
    %162 = vmatpush1.bf16.msra.mxu0 0
    %163 = vmatprep.subr.bf16.mxu0 0
    %164 = vmatpush1.bf16.msra.mxu0 0
    %165 = vmatprep.subr.bf16.mxu0 0
    %166 = vmatpush1.bf16.msra.mxu0 0
    %167 = vmatprep.subr.bf16.mxu0 0
    %168 = vmatpush1.bf16.msra.mxu0 0
    %169 = vmatprep.subr.bf16.mxu0 0
    %170 = vmatpush1.bf16.msra.mxu0 0
    %171 = vmatprep.subr.bf16.mxu0 0
    %172 = vmatpush1.bf16.msra.mxu0 0
    %173 = vmatprep.mubr.bf16.mxu0 0
    %174 = vmatmul.mubr.bf16.gmra.mrb[0].mxu0 %v139
    %v175 = vpop.f32.mrb[0].mxu0
    %v176 = vadd.f32 %v111, %v175
    %v177 = vpop.f32.mrb[0].mxu0
    %v178 = vpop.f32.mrb[0].mxu0
    %v179 = vpop.f32.mrb[0].mxu0
    %180 = vdwg.mxu0
    %v181 = vmax.f32 %v176, 0.0
    %v182 = vld [vmem:[%s5] sm:$0xf]
    %v183 = vld [vmem:[%s5 + $0x4] sm:$0xf]
    %v184 = vld [vmem:[%s5 + $0x8] sm:$0xf]
    %v185 = vld [vmem:[%s5 + $0xc] sm:$0xf]
    %v186 = vld [vmem:[%s5 + $0x10] sm:$0xf]
    %v187 = vld [vmem:[%s5 + $0x14] sm:$0xf]
    %v188 = vld [vmem:[%s5 + $0x18] sm:$0xf]
    %v189 = vld [vmem:[%s5 + $0x1c] sm:$0xf]
    %v190 = vld [vmem:[%s6] sm:$0x1]
    %v191 = vpack.c.bf16 %v181, %v181
    %v193 = vlaneseq
    %v194 = vshrl.u32 %v193, 7
    %v195 = vsub.s32 0, %v194
    %v196 = vrot.slane %v190, %v195
    %v206 = vunpack.c.l.b16 %v182
    %v207 = vunpack.c.l.b16 %v183
    %v208 = vunpack.c.l.b16 %v184
    %v209 = vunpack.c.l.b16 %v185
    %v210 = vunpack.c.l.b16 %v186
    %v211 = vunpack.c.l.b16 %v187
    %v212 = vunpack.c.l.b16 %v188
    %v213 = vunpack.c.l.b16 %v189
    %v214 = vpack.c.b16 %v207, %v206
    %v215 = vpack.c.b16 %v209, %v208
    %v216 = vpack.c.b16 %v211, %v210
    %v217 = vpack.c.b16 %v213, %v212
    %v223 = vsel %vm137, %v191, 0
    %225 = vmatprep.subr.bf16.mxu0 0
    %226 = vmatpush1.bf16.msra.mxu0 %v214
    %227 = vmatprep.subr.bf16.mxu0 0
    %228 = vmatpush1.bf16.msra.mxu0 %v215
    %229 = vmatprep.subr.bf16.mxu0 0
    %230 = vmatpush1.bf16.msra.mxu0 %v216
    %231 = vmatprep.subr.bf16.mxu0 0
    %232 = vmatpush1.bf16.msra.mxu0 %v217
    %233 = vmatprep.subr.bf16.mxu0 0
    %234 = vmatpush1.bf16.msra.mxu0 0
    %235 = vmatprep.subr.bf16.mxu0 0
    %236 = vmatpush1.bf16.msra.mxu0 0
    %237 = vmatprep.subr.bf16.mxu0 0
    %238 = vmatpush1.bf16.msra.mxu0 0
    %239 = vmatprep.subr.bf16.mxu0 0
    %240 = vmatpush1.bf16.msra.mxu0 0
    %241 = vmatprep.subr.bf16.mxu0 0
    %242 = vmatpush1.bf16.msra.mxu0 0
    %243 = vmatprep.subr.bf16.mxu0 0
    %244 = vmatpush1.bf16.msra.mxu0 0
    %245 = vmatprep.subr.bf16.mxu0 0
    %246 = vmatpush1.bf16.msra.mxu0 0
    %247 = vmatprep.subr.bf16.mxu0 0
    %248 = vmatpush1.bf16.msra.mxu0 0
    %249 = vmatprep.subr.bf16.mxu0 0
    %250 = vmatpush1.bf16.msra.mxu0 0
    %251 = vmatprep.subr.bf16.mxu0 0
    %252 = vmatpush1.bf16.msra.mxu0 0
    %253 = vmatprep.subr.bf16.mxu0 0
    %254 = vmatpush1.bf16.msra.mxu0 0
    %255 = vmatprep.subr.bf16.mxu0 0
    %256 = vmatpush1.bf16.msra.mxu0 0
    %257 = vmatprep.mubr.bf16.mxu0 0
    %258 = vmatmul.mubr.bf16.gmra.mrb[0].mxu0 %v223
    %v259 = vpop.f32.mrb[0].mxu0
    %v260 = vadd.f32 %v196, %v259
    %v261 = vpop.f32.mrb[0].mxu0
    %v262 = vpop.f32.mrb[0].mxu0
    %v263 = vpop.f32.mrb[0].mxu0
    %264 = vdwg.mxu0
    %v265 = vtanh.pop %v260
    %266 = vst [vmem:[#allocation2] sm:$0xff] %v265
    // Predicated region
    $region30: #{fwd.1} parent=1 // pred_check
      _
    $region31: #{fwd.1} parent=1 // pred_check_branch
      %268 = sbr.rel (0) target = $region33
    $region32: #{fwd.1} parent=1 // pred_region
      %s270 = ssub.s32 128, 128
      %271 = vsyncadd [#allocation3], %s270
      %s273 = sshll.u32 [#allocation2], 4
      %s274 = int_to_ptr.vmem [resolvable:$true] %s273
      %276 = dma.vmem_to_hbm [thread:$0]  %s274, 128, %s7, [#allocation3]
    $region33: #{fwd.1} parent=1 // pred_fallthru
      _
    // Predicated region
    $region34: #{fwd.1} parent=1 // pred_check
      _
    $region35: #{fwd.1} parent=1 // pred_check_branch
      %278 = sbr.rel (0) target = $region37
    $region36: #{fwd.1} parent=1 // pred_region
      %279 = dma.done [#allocation3], 128
    $region37: #{fwd.1} parent=1 // pred_fallthru
      _
    %280 = vsyncpa [#allocation3], 1

</llo_original>
